<compile_context>
chip_gen: v5e
topology: v5e:2x2
jax: 0.10.0
libtpu: 0.0.40
codegen_flags: <defaults>
</compile_context>

<pallas_src>
import functools

import jax
import jax.numpy as jnp
import numpy as np
from jax.experimental import pallas as pl
from jax.experimental.pallas import tpu as pltpu

BN_EPS = 1e-5
OUT_LANES = 128  # lane-dense output width


def _pick_batch_tile(b):
    for tb in (512, 256, 128, 64, 32, 16, 8):
        if b % tb == 0:
            return tb
    return b  # small / odd batch: single full-batch block


# --------------------------------------------------------------------------- #
# Pass 1: BatchNorm batch statistics -> folded affine (scale, shift)
# --------------------------------------------------------------------------- #
def bn_stats_kernel(state_ref, gamma_ref, beta_ref, stats_ref,
                    sum_ref, sq_ref, *, total_rows):
    i = pl.program_id(0)

    @pl.when(i == 0)
    def _():
        sum_ref[...] = jnp.zeros_like(sum_ref)
        sq_ref[...] = jnp.zeros_like(sq_ref)

    x = state_ref[...].astype(jnp.float32)                     # (TB, S)
    sum_ref[...] += jnp.sum(x, axis=0, keepdims=True)
    sq_ref[...] += jnp.sum(x * x, axis=0, keepdims=True)

    @pl.when(i == pl.num_programs(0) - 1)
    def _():
        n = jnp.float32(total_rows)
        mean = sum_ref[...] / n
        var = sq_ref[...] / n - mean * mean                    # biased variance
        inv_std = jax.lax.rsqrt(var + BN_EPS)                  # EUP slot
        scale = gamma_ref[...] * inv_std
        shift = beta_ref[...] - mean * scale
        stats_ref[...] = jnp.concatenate([scale, shift], axis=0)


def bn_affine_stats(state, gamma, beta):
    B, S = state.shape
    TB = _pick_batch_tile(B)
    grid = (B // TB,)
    kernel = functools.partial(bn_stats_kernel, total_rows=B)
    return pl.pallas_call(
        kernel,
        out_shape=jax.ShapeDtypeStruct((2, S), jnp.float32),
        grid_spec=pltpu.PrefetchScalarGridSpec(
            num_scalar_prefetch=0,
            grid=grid,
            in_specs=[pl.BlockSpec((TB, S), lambda i: (i, 0)),
                      pl.BlockSpec((1, S), lambda i: (0, 0)),
                      pl.BlockSpec((1, S), lambda i: (0, 0))],
            out_specs=pl.BlockSpec((2, S), lambda i: (0, 0)),
            scratch_shapes=[pltpu.VMEM((1, S), jnp.float32),
                            pltpu.VMEM((1, S), jnp.float32)],
        ),
        compiler_params=pltpu.CompilerParams(
            dimension_semantics=("arbitrary",)),   # cross-tile reduction
        cost_estimate=pl.CostEstimate(
            flops=4 * B * S, transcendentals=S,
            bytes_accessed=4 * (B * S + 4 * S)),
    )(state, gamma, beta)


# --------------------------------------------------------------------------- #
# Pass 2: normalize + MLP (parallel over batch tiles)
# --------------------------------------------------------------------------- #
def critic_mlp_kernel(state_ref, action_ref, stats_ref, w1_ref, w2s_ref,
                      slab_ref, out_ref, *, action_size, h1_dim, h2_dim):
    x = state_ref[...].astype(jnp.float32)                     # (TB, S)
    a = action_ref[...].astype(jnp.float32)                    # (TB, A)

    st = stats_ref[...]                                        # (2, S)
    xn = x * st[0:1, :] + st[1:2, :]                           # folded BN affine

    # packed small-parameter slab rows:
    #   [0:A]  -> w2a rows,  [A] -> b1,  [A+1] -> b2,  [A+2] -> w3^T,  [A+3] -> b3
    b1 = slab_ref[action_size:action_size + 1, :h1_dim]
    b2 = slab_ref[action_size + 1:action_size + 2, :h2_dim]
    w3 = slab_ref[action_size + 2:action_size + 3, :h2_dim]
    b3 = slab_ref[action_size + 3:action_size + 4, :OUT_LANES]

    # --- Linear(S -> H1) + ReLU (MXU) ---
    h1 = jnp.dot(xn, w1_ref[...], preferred_element_type=jnp.float32) + b1
    h1 = jnp.maximum(h1, 0.0)                                  # (TB, H1)

    # --- Linear(H1 + A -> H2) + ReLU: MXU for the H1 part, rank-1 VPU updates
    #     for the K=A action part (no <2%-utilized MXU push). ---
    h2 = jnp.dot(h1, w2s_ref[...], preferred_element_type=jnp.float32) + b2
    for j in range(action_size):                               # static unroll, A tiny
        h2 = h2 + a[:, j:j + 1] * slab_ref[j:j + 1, :h2_dim]
    h2 = jnp.maximum(h2, 0.0)                                  # (TB, H2)

    # --- Linear(H2 -> 1) as VPU multiply + cross-lane reduce (no N=1 matmul) ---
    q = jnp.sum(h2 * w3, axis=-1, keepdims=True)               # (TB, 1)

    # lane-dense store: q broadcast across 128 lanes; wrapper slices column 0.
    out_ref[...] = q + b3


def critic_forward(state, action, params):
    gamma, beta, w1, w2s, slab = params
    B, S = state.shape
    A = action.shape[1]
    H1 = w1.shape[1]
    H2 = w2s.shape[1]

    # Pass 1: BN batch statistics folded with gamma/beta into (scale, shift).
    stats = bn_affine_stats(state, gamma, beta)

    TB = _pick_batch_tile(B)
    grid = (B // TB,)

    flops = 2 * B * (S * H1 + H1 * H2 + A * H2 + H2) + 4 * B * S
    bytes_accessed = 4 * (state.size + action.size + stats.size + w1.size
                          + w2s.size + slab.size + B * OUT_LANES)

    kernel = functools.partial(critic_mlp_kernel, action_size=A,
                               h1_dim=H1, h2_dim=H2)

    out = pl.pallas_call(
        kernel,
        out_shape=jax.ShapeDtypeStruct((B, OUT_LANES), jnp.float32),
        grid_spec=pltpu.PrefetchScalarGridSpec(
            num_scalar_prefetch=0,
            grid=grid,
            in_specs=[pl.BlockSpec((TB, S), lambda i: (i, 0)),
                      pl.BlockSpec((TB, A), lambda i: (i, 0)),
                      pl.BlockSpec((2, S), lambda i: (0, 0)),
                      pl.BlockSpec((S, H1), lambda i: (0, 0)),
                      pl.BlockSpec((H1, H2), lambda i: (0, 0)),
                      pl.BlockSpec(slab.shape, lambda i: (0, 0))],
            out_specs=pl.BlockSpec((TB, OUT_LANES), lambda i: (i, 0)),
        ),
        compiler_params=pltpu.CompilerParams(
            dimension_semantics=("parallel",)),    # shard batch over v7x's 2 TCs
        cost_estimate=pl.CostEstimate(flops=flops, transcendentals=0,
                                      bytes_accessed=bytes_accessed),
    )(state, action, stats, w1, w2s, slab)

    return out[:, :1]                                           # (B, 1)


# --------------------------------------------------------------------------- #
# Parameter construction / reference
# --------------------------------------------------------------------------- #
def _pack_small_params(b1, w2a, b2, w3, b3, *, h1, h2, action_size):
    """Pack all tiny params into one lane-dense (A+4, W) f32 slab."""
    W = max(h1, h2, OUT_LANES)
    slab = np.zeros((action_size + 4, W), np.float32)
    slab[:action_size, :h2] = np.asarray(w2a)                   # w2a rows
    slab[action_size, :h1] = np.asarray(b1)[0]                  # b1
    slab[action_size + 1, :h2] = np.asarray(b2)[0]              # b2
    slab[action_size + 2, :h2] = np.asarray(w3)[:, 0]           # w3 (transposed)
    slab[action_size + 3, :] = float(np.asarray(b3)[0, 0])      # b3 broadcast
    return jnp.asarray(slab)


def init_params(key, state_size, action_size, h1, h2):
    """Deterministic init mimicking PyTorch defaults (uniform(-1/sqrt(fan_in)))."""
    ks = jax.random.split(key, 3)

    def lin(k, fan_in, fan_out):
        bound = 1.0 / np.sqrt(fan_in)
        kw, kb = jax.random.split(k)
        w = jax.random.uniform(kw, (fan_in, fan_out), jnp.float32, -bound, bound)
        b = jax.random.uniform(kb, (1, fan_out), jnp.float32, -bound, bound)
        return w, b

    gamma = jnp.ones((1, state_size), jnp.float32)              # BatchNorm1d affine
    beta = jnp.zeros((1, state_size), jnp.float32)

    w1, b1 = lin(ks[0], state_size, h1)
    w2_full, b2 = lin(ks[1], h1 + action_size, h2)              # concat layer
    w2s = w2_full[:h1]                                          # acts on state_rep
    w2a = w2_full[h1:]                                          # acts on action
    w3, b3 = lin(ks[2], h2, 1)

    slab = _pack_small_params(b1, w2a, b2, w3, b3,
                              h1=h1, h2=h2, action_size=action_size)
    return (gamma, beta, w1, w2s, slab)


def critic_reference(state, action, params):
    gamma, beta, w1, w2s, slab = params
    A = action.shape[1]
    H1 = w1.shape[1]
    H2 = w2s.shape[1]
    w2a = slab[:A, :H2]
    b1 = slab[A:A + 1, :H1]
    b2 = slab[A + 1:A + 2, :H2]
    w3 = slab[A + 2:A + 3, :H2]
    b3 = slab[A + 3, 0]

    mean = jnp.mean(state, axis=0, keepdims=True)
    var = jnp.mean((state - mean) ** 2, axis=0, keepdims=True)
    xn = (state - mean) * jax.lax.rsqrt(var + BN_EPS) * gamma + beta
    h1 = jnp.maximum(xn @ w1 + b1, 0.0)
    h2 = jnp.maximum(h1 @ w2s + action @ w2a + b2, 0.0)
    return h2 @ w3.T + b3


if __name__ == "__main__":
    # Tennis-like sizes, kept small.
    B, STATE_SIZE, ACTION_SIZE = 8, 24, 2
    H1, H2 = 128, 128   # state_layer_units, state_action_layer_units

    root = jax.random.PRNGKey(0)
    k_state, k_action, k_params = jax.random.split(root, 3)

    state = jax.random.normal(k_state, (B, STATE_SIZE), jnp.float32)
    action = jax.random.uniform(k_action, (B, ACTION_SIZE), jnp.float32, -1.0, 1.0)
    params = init_params(k_params, STATE_SIZE, ACTION_SIZE, H1, H2)

    q = jax.block_until_ready(critic_forward(state, action, params))
    q_ref = jax.block_until_ready(critic_reference(state, action, params))

    np.testing.assert_allclose(np.asarray(q), np.asarray(q_ref),
                               rtol=1e-4, atol=1e-4)
    assert q.shape == (B, 1)

    print("KERNEL_OK")
</pallas_src>

<mosaic_0001>
module attributes {stable_mosaic.version = 11 : i64} {
  func.func @bn_stats_kernel(%arg0: i32, %arg1: memref<8x24xf32, #tpu.memory_space<vmem>>, %arg2: memref<1x24xf32, #tpu.memory_space<vmem>>, %arg3: memref<1x24xf32, #tpu.memory_space<vmem>>, %arg4: memref<2x24xf32, #tpu.memory_space<vmem>>, %arg5: memref<1x24xf32, #tpu.memory_space<vmem>>, %arg6: memref<1x24xf32, #tpu.memory_space<vmem>>) attributes {dimension_semantics = [#tpu.dimension_semantics<arbitrary>], iteration_bounds = array<i64: 1>, scalar_prefetch = 0 : i64, scratch_operands = 2 : i64, tpu.core_type = #tpu.core_type<tc>, window_params = [{transform_indices = @transform_0, window_bounds = array<i64: 8, 24>}, {pipeline_mode = #tpu.pipeline_mode<synchronous>, transform_indices = @transform_1, window_bounds = array<i64: 1, 24>}, {pipeline_mode = #tpu.pipeline_mode<synchronous>, transform_indices = @transform_2, window_bounds = array<i64: 1, 24>}, {pipeline_mode = #tpu.pipeline_mode<synchronous>, transform_indices = @transform_3, window_bounds = array<i64: 2, 24>}]} {
    %c0_i32 = arith.constant 0 : i32
    %0 = arith.cmpi eq, %arg0, %c0_i32 : i32
    %1 = arith.extui %0 : i1 to i32
    %c0_i32_0 = arith.constant 0 : i32
    %2 = arith.cmpi ne, %1, %c0_i32_0 : i32
    scf.if %2 {
      %cst_13 = arith.constant 0.000000e+00 : f32
      %18 = vector.broadcast %cst_13 : f32 to vector<1x24xf32>
      %c0_14 = arith.constant 0 : index
      %c0_15 = arith.constant 0 : index
      %19 = vector.load %arg5[%c0_14, %c0_15] : memref<1x24xf32, #tpu.memory_space<vmem>>, vector<1x24xf32>
      tpu.vector_store %arg5[%c0_14, %c0_15], %18 {strides = array<i32>} : memref<1x24xf32, #tpu.memory_space<vmem>>, vector<1x24xf32>,
      %cst_16 = arith.constant 0.000000e+00 : f32
      %20 = vector.broadcast %cst_16 : f32 to vector<1x24xf32>
      %c0_17 = arith.constant 0 : index
      %c0_18 = arith.constant 0 : index
      %21 = vector.load %arg6[%c0_17, %c0_18] : memref<1x24xf32, #tpu.memory_space<vmem>>, vector<1x24xf32>
      tpu.vector_store %arg6[%c0_17, %c0_18], %20 {strides = array<i32>} : memref<1x24xf32, #tpu.memory_space<vmem>>, vector<1x24xf32>,
    } else {
    }
    %c0 = arith.constant 0 : index
    %c0_1 = arith.constant 0 : index
    %3 = vector.load %arg1[%c0, %c0_1] : memref<8x24xf32, #tpu.memory_space<vmem>>, vector<8x24xf32>
    %c0_2 = arith.constant 0 : index
    %c0_3 = arith.constant 0 : index
    %4 = vector.load %arg5[%c0_2, %c0_3] : memref<1x24xf32, #tpu.memory_space<vmem>>, vector<1x24xf32>
    %cst = arith.constant dense<0.000000e+00> : vector<24xf32>
    %5 = vector.multi_reduction <add>, %3, %cst [0] : vector<8x24xf32> to vector<24xf32>
    %6 = vector.shape_cast %5 : vector<24xf32> to vector<1x24xf32>
    %7 = arith.addf %4, %6 : vector<1x24xf32>
    %c0_4 = arith.constant 0 : index
    %c0_5 = arith.constant 0 : index
    %8 = vector.load %arg5[%c0_4, %c0_5] : memref<1x24xf32, #tpu.memory_space<vmem>>, vector<1x24xf32>
    tpu.vector_store %arg5[%c0_4, %c0_5], %7 {strides = array<i32>} : memref<1x24xf32, #tpu.memory_space<vmem>>, vector<1x24xf32>,
    %c0_6 = arith.constant 0 : index
    %c0_7 = arith.constant 0 : index
    %9 = vector.load %arg6[%c0_6, %c0_7] : memref<1x24xf32, #tpu.memory_space<vmem>>, vector<1x24xf32>
    %10 = arith.mulf %3, %3 : vector<8x24xf32>
    %cst_8 = arith.constant dense<0.000000e+00> : vector<24xf32>
    %11 = vector.multi_reduction <add>, %10, %cst_8 [0] : vector<8x24xf32> to vector<24xf32>
    %12 = vector.shape_cast %11 : vector<24xf32> to vector<1x24xf32>
    %13 = arith.addf %9, %12 : vector<1x24xf32>
    %c0_9 = arith.constant 0 : index
    %c0_10 = arith.constant 0 : index
    %14 = vector.load %arg6[%c0_9, %c0_10] : memref<1x24xf32, #tpu.memory_space<vmem>>, vector<1x24xf32>
    tpu.vector_store %arg6[%c0_9, %c0_10], %13 {strides = array<i32>} : memref<1x24xf32, #tpu.memory_space<vmem>>, vector<1x24xf32>,
    %c0_i32_11 = arith.constant 0 : i32
    %15 = arith.cmpi eq, %arg0, %c0_i32_11 : i32
    %16 = arith.extui %15 : i1 to i32
    %c0_i32_12 = arith.constant 0 : i32
    %17 = arith.cmpi ne, %16, %c0_i32_12 : i32
    scf.if %17 {
      %c0_13 = arith.constant 0 : index
      %c0_14 = arith.constant 0 : index
      %18 = vector.load %arg5[%c0_13, %c0_14] : memref<1x24xf32, #tpu.memory_space<vmem>>, vector<1x24xf32>
      %cst_15 = arith.constant 8.000000e+00 : f32
      %19 = vector.broadcast %cst_15 : f32 to vector<1x24xf32>
      %20 = arith.divf %18, %19 : vector<1x24xf32>
      %c0_16 = arith.constant 0 : index
      %c0_17 = arith.constant 0 : index
      %21 = vector.load %arg6[%c0_16, %c0_17] : memref<1x24xf32, #tpu.memory_space<vmem>>, vector<1x24xf32>
      %cst_18 = arith.constant 8.000000e+00 : f32
      %22 = vector.broadcast %cst_18 : f32 to vector<1x24xf32>
      %23 = arith.divf %21, %22 : vector<1x24xf32>
      %24 = arith.mulf %20, %20 : vector<1x24xf32>
      %25 = arith.subf %23, %24 : vector<1x24xf32>
      %cst_19 = arith.constant 9.99999974E-6 : f32
      %26 = vector.broadcast %cst_19 : f32 to vector<1x24xf32>
      %27 = arith.addf %25, %26 : vector<1x24xf32>
      %28 = math.rsqrt %27 : vector<1x24xf32>
      %c0_20 = arith.constant 0 : index
      %c0_21 = arith.constant 0 : index
      %29 = vector.load %arg2[%c0_20, %c0_21] : memref<1x24xf32, #tpu.memory_space<vmem>>, vector<1x24xf32>
      %30 = arith.mulf %29, %28 : vector<1x24xf32>
      %c0_22 = arith.constant 0 : index
      %c0_23 = arith.constant 0 : index
      %31 = vector.load %arg3[%c0_22, %c0_23] : memref<1x24xf32, #tpu.memory_space<vmem>>, vector<1x24xf32>
      %32 = arith.mulf %20, %30 : vector<1x24xf32>
      %33 = arith.subf %31, %32 : vector<1x24xf32>
      %34 = tpu.concatenate %30, %33 in 0 : vector<1x24xf32>, vector<1x24xf32> -> vector<2x24xf32>
      %c0_24 = arith.constant 0 : index
      %c0_25 = arith.constant 0 : index
      %35 = vector.load %arg4[%c0_24, %c0_25] : memref<2x24xf32, #tpu.memory_space<vmem>>, vector<2x24xf32>
      tpu.vector_store %arg4[%c0_24, %c0_25], %34 {strides = array<i32>} : memref<2x24xf32, #tpu.memory_space<vmem>>, vector<2x24xf32>,
    } else {
    }
    return
  }
  func.func @transform_0(%arg0: i32) -> (i32, i32) {
    %c0_i32 = arith.constant 0 : i32
    %c0_i32_0 = arith.constant 0 : i32
    return %arg0, %c0_i32 : i32, i32
  }
  func.func @transform_1(%arg0: i32) -> (i32, i32) {
    %c0_i32 = arith.constant 0 : i32
    %c0_i32_0 = arith.constant 0 : i32
    %c0_i32_1 = arith.constant 0 : i32
    return %c0_i32, %c0_i32_0 : i32, i32
  }
  func.func @transform_2(%arg0: i32) -> (i32, i32) {
    %c0_i32 = arith.constant 0 : i32
    %c0_i32_0 = arith.constant 0 : i32
    %c0_i32_1 = arith.constant 0 : i32
    return %c0_i32, %c0_i32_0 : i32, i32
  }
  func.func @transform_3(%arg0: i32) -> (i32, i32) {
    %c0_i32 = arith.constant 0 : i32
    %c0_i32_0 = arith.constant 0 : i32
    %c0_i32_1 = arith.constant 0 : i32
    return %c0_i32, %c0_i32_0 : i32, i32
  }
}

</mosaic_0001>

<llo_original>
// kernel: tpu_custom_call.1
$region0: #{tpu_custom_call.1}
  #allocation0 [shape = 'u32[]', space=smem, size = 0x4, offset = 0x4, fixed_abs, tag = 'smem constant byte address 0x4 - core index']
  #allocation1 [shape = 'u32[72,128]{1,0:T(1,128)}', space=vmem, size = 0x9000, scoped, tag = 'internal scratch']
  #allocation2 [shape = 'f32[1,24]{1,0:T(1,128)}', space=vmem, size = 0x200, scoped, tag = 'scratch operand']
  #allocation3 [shape = 'f32[1,24]{1,0:T(1,128)}', space=vmem, size = 0x200, scoped, tag = 'scratch operand']
  %s0 = inlined_call_operand.hbm [shape: f32[8,24], index: 0, kind: input, shape index: {}]
  %s1 = inlined_call_operand.hbm [shape: f32[1,24], index: 1, kind: input, shape index: {}]
  %s2 = inlined_call_operand.vmem [shape: f32[1,24], index: 2, kind: input, shape index: {}]
  %s3 = inlined_call_operand.hbm [shape: f32[2,24], index: 3, kind: output, shape index: {}]
  %s4 = sld [smem:[#allocation0]]
  $region38: #{tpu_custom_call.1} parent=0
    _
  %s6 = ssub.s32 1, %s4
  %s7 = scalar_select 0, %s6, %s4
  $region1: #{tpu_custom_call.1} parent=0
    #allocation4 [shape = 'u8[4096]{0}', space=vmem, size = 0x1000, scoped, tag = 'input window, operand 0, single buffered']
    #allocation5 [shape = 's32[1]{0}', space=sflag, size = 0x4, scoped, tag = 'scoped memory for tpu_custom_call.1']
    #allocation6 [shape = 's32[1]{0}', space=sflag, size = 0x4, scoped, tag = 'scoped memory for tpu_custom_call.1']
    #allocation7 [shape = 'u8[512]{0}', space=vmem, size = 0x400, scoped, tag = 'input window, operand 1, single buffered']
    #allocation8 [shape = 's32[1]{0}', space=sflag, size = 0x4, scoped, tag = 'scoped memory for tpu_custom_call.1']
    #allocation9 [shape = 'u8[1024]{0}', space=vmem, size = 0x400, scoped, tag = 'output window, operand 0, single buffered']
    %8 = vsyncpa [#allocation5], 0
    %9 = vsyncpa [#allocation8], 0
    %10 = vsyncpa [#allocation6], 0
    // Predicated region
    $region2: #{tpu_custom_call.1} parent=1 // pred_check
      _
    $region3: #{tpu_custom_call.1} parent=1 // pred_check_branch
      %12 = sbr.rel (0) target = $region5
    $region4: #{tpu_custom_call.1} parent=1 // pred_region
      %14 = vsyncadd [#allocation5], 0
      %s16 = sshll.u32 %s0, 4
      %s17 = int_to_ptr.hbm [resolvable:$true] %s16
      %s18 = sshll.u32 [#allocation4], 4
      %s19 = int_to_ptr.vmem [resolvable:$true] %s18
      %21 = dma.hbm_to_vmem [thread:$0]  %s17, 128, %s19, [#allocation5]
    $region5: #{tpu_custom_call.1} parent=1 // pred_fallthru
      _
    // Predicated region
    $region6: #{tpu_custom_call.1} parent=1 // pred_check
      _
    $region7: #{tpu_custom_call.1} parent=1 // pred_check_branch
      %23 = sbr.rel (0) target = $region9
    $region8: #{tpu_custom_call.1} parent=1 // pred_region
      %25 = vsyncadd [#allocation8], 0
      %s27 = sshll.u32 %s1, 4
      %s28 = int_to_ptr.hbm [resolvable:$true] %s27
      %s29 = sshll.u32 [#allocation7], 4
      %s30 = int_to_ptr.vmem [resolvable:$true] %s29
      %32 = dma.hbm_to_vmem [thread:$0]  %s28, 16, %s30, [#allocation8]
    $region9: #{tpu_custom_call.1} parent=1 // pred_fallthru
      _
    // Predicated region
    $region10: #{tpu_custom_call.1} parent=1 // pred_check
      _
    $region11: #{tpu_custom_call.1} parent=1 // pred_check_branch
      %34 = sbr.rel (0) target = $region13
    $region12: #{tpu_custom_call.1} parent=1 // pred_region
      _
    $region13: #{tpu_custom_call.1} parent=1 // pred_fallthru
      _
    // Predicated region
    $region14: #{tpu_custom_call.1} parent=1 // pred_check
      _
    $region15: #{tpu_custom_call.1} parent=1 // pred_check_branch
      %36 = sbr.rel (0) target = $region17
    $region16: #{tpu_custom_call.1} parent=1 // pred_region
      %38 = dma.done [#allocation5], 128
    $region17: #{tpu_custom_call.1} parent=1 // pred_fallthru
      _
    // Predicated region
    $region18: #{tpu_custom_call.1} parent=1 // pred_check
      _
    $region19: #{tpu_custom_call.1} parent=1 // pred_check_branch
      %40 = sbr.rel (0) target = $region21
    $region20: #{tpu_custom_call.1} parent=1 // pred_region
      %42 = dma.done [#allocation8], 16
    $region21: #{tpu_custom_call.1} parent=1 // pred_fallthru
      _
    %p43 = scmp.eq.s32.totalorder 0, 0
    // Predicated region
    $region22: #{tpu_custom_call.1} parent=1 // pred_check
      %p44 = pneg %p43
    $region23: #{tpu_custom_call.1} parent=1 // pred_check_branch
      %46 = sbr.rel (%p44) target = $region25
    $region24: #{tpu_custom_call.1} parent=1 // pred_region
      %vm47 = vcmask 188416
      %48 = vst.msk [vmem:[#allocation2] sm:$0x1] %vm47, 0.0
      %49 = vst.msk [vmem:[#allocation3] sm:$0x1] %vm47, 0.0
    $region25: #{tpu_custom_call.1} parent=1 // pred_fallthru
      _
    %v50 = vld [vmem:[#allocation4] sm:$0xff]
    %v51 = vld [vmem:[#allocation2] sm:$0x1]
    %vm52 = vcmask 195584
    %v53 = vsel %vm52, %v50, 0.0
    %v54 = vrot.slane %v53, 4
    %v55 = vadd.f32 %v53, %v54
    %v56 = vrot.slane %v55, 2
    %v57 = vadd.f32 %v55, %v56
    %v58 = vrot.slane %v57, 1
    %v59 = vadd.f32 %v57, %v58
    %v60 = vadd.f32 %v51, %v59
    %vm61 = vcmask 188416
    %62 = vst.msk [vmem:[#allocation2] sm:$0x1] %vm61, %v60
    %v63 = vld [vmem:[#allocation3] sm:$0x1]
    %v64 = vmul.f32 %v50, %v50
    %v65 = vsel %vm52, %v64, 0.0
    %v66 = vrot.slane %v65, 4
    %v67 = vadd.f32 %v65, %v66
    %v68 = vrot.slane %v67, 2
    %v69 = vadd.f32 %v67, %v68
    %v70 = vrot.slane %v69, 1
    %v71 = vadd.f32 %v69, %v70
    %v72 = vadd.f32 %v63, %v71
    %73 = vst.msk [vmem:[#allocation3] sm:$0x1] %vm61, %v72
    // Predicated region
    $region26: #{tpu_custom_call.1} parent=1 // pred_check
      %p74 = pneg %p43
    $region27: #{tpu_custom_call.1} parent=1 // pred_check_branch
      %76 = sbr.rel (%p74) target = $region29
    $region28: #{tpu_custom_call.1} parent=1 // pred_region
      %v77 = vld [vmem:[#allocation2] sm:$0x1]
      %v78 = vrcp.pop 8.0
      %v79 = vmul.f32 8.0, %v78
      %v80 = vsub.f32 1.0, %v79
      %v81 = vmul.f32 %v78, %v80
      %v82 = vadd.f32 %v78, %v81
      %vm83 = vweird.f32 %v78
      %v84 = vsel %vm83, %v78, %v82
      %v85 = vmul.f32 %v77, %v84
      %v86 = vld [vmem:[#allocation3] sm:$0x1]
      %v87 = vmul.f32 %v86, %v84
      %v88 = vmul.f32 %v85, %v85
      %v89 = vsub.f32 %v87, %v88
      %v90 = vadd.f32 %v89, 1e-05
      %v91 = vrsqrt.pop %v90
      %v92 = vmul.f32 %v91, %v90
      %v93 = vmul.f32 %v92, %v91
      %v94 = vmul.f32 0.5, %v93
      %v95 = vsub.f32 1.5, %v94
      %v96 = vmul.f32 %v91, %v95
      %vm97 = vweird.f32 %v90
      %vm98 = vweird.f32 %v91
      %vm99 = vmor %vm97, %vm98
      %v100 = vsel %vm99, %v91, %v96
      %v101 = vld [vmem:[#allocation7] sm:$0x1]
      %v102 = vmul.f32 %v101, %v100
      %v103 = vld [vmem:[%s2] sm:$0x1]
      %v104 = vmul.f32 %v85, %v102
      %v105 = vsub.f32 %v103, %v104
      %v107 = vperm.slane %v105, 0
      %vm109 = vcmask 1040384
      %v110 = vsel %vm109, %v102, %v107
      %vm111 = vcmask 189440
      %112 = vst.msk [vmem:[#allocation9] sm:$0x3] %vm111, %v110
    $region29: #{tpu_custom_call.1} parent=1 // pred_fallthru
      _
    // Predicated region
    $region30: #{tpu_custom_call.1} parent=1 // pred_check
      _
    $region31: #{tpu_custom_call.1} parent=1 // pred_check_branch
      %114 = sbr.rel (0) target = $region33
    $region32: #{tpu_custom_call.1} parent=1 // pred_region
      %116 = vsyncadd [#allocation6], 0
      %s118 = sshll.u32 [#allocation9], 4
      %s119 = int_to_ptr.vmem [resolvable:$true] %s118
      %s120 = sshll.u32 %s3, 4
      %s121 = int_to_ptr.hbm [resolvable:$true] %s120
      %123 = dma.vmem_to_hbm [thread:$0]  %s119, 32, %s121, [#allocation6]
    $region33: #{tpu_custom_call.1} parent=1 // pred_fallthru
      _
    // Predicated region
    $region34: #{tpu_custom_call.1} parent=1 // pred_check
      _
    $region35: #{tpu_custom_call.1} parent=1 // pred_check_branch
      %125 = sbr.rel (0) target = $region37
    $region36: #{tpu_custom_call.1} parent=1 // pred_region
      %127 = dma.done [#allocation6], 32
    $region37: #{tpu_custom_call.1} parent=1 // pred_fallthru
      _
    %128 = vsyncpa [#allocation5], 1
    %129 = vsyncpa [#allocation8], 1
    %130 = vsyncpa [#allocation6], 1

</llo_original>
